<compile_context>
chip_gen: v5e
topology: v5e:2x2
jax: 0.10.0
libtpu: 0.0.40
codegen_flags: <defaults>
</compile_context>

<pallas_src>
import functools

import jax
import jax.numpy as jnp
from jax.experimental import pallas as pl
from jax.experimental.pallas import tpu as pltpu

_LANE = 128      # vreg lane width (last dim)
_SUBLANE = 8     # vreg sublane width (second-to-last dim)
_MAX_TM = 512    # max batch-rows per grid step


def _round_up(x, m):
    return ((x + m - 1) // m) * m


def _make_fused_mlp_kernel(num_layers, negative_slope):
    """Kernel refs: (x_ref, w1,b1, w2,b2, ..., o_ref). Weights already (in, out)."""

    def kernel(*refs):
        x_ref = refs[0]
        o_ref = refs[-1]
        wb_refs = refs[1:-1]
        y = x_ref[...]                       # (tm, K0_pad) f32, lives in vregs
        for i in range(num_layers):
            w = wb_refs[2 * i][...]          # (K_pad, N_pad)
            b = wb_refs[2 * i + 1][...]      # (1, N_pad)
            # Default MXU precision matches the pure-JAX reference; pass
            # precision=jax.lax.Precision.HIGHEST if strict f32 parity with
            # PyTorch is needed at much larger K.
            y = jnp.dot(y, w, preferred_element_type=jnp.float32) + b
            if i < num_layers - 1:           # LeakyReLU on all but last layer
                y = jnp.where(y > 0.0, y, negative_slope * y)
        o_ref[...] = y.astype(o_ref.dtype)

    return kernel


def init_feedforward_params(key, hidden_dims):
    """PyTorch nn.Linear-style params: w (out, in), b (out,), U(+/- 1/sqrt(fan_in))."""
    params = []
    for i in range(len(hidden_dims) - 1):
        fan_in, fan_out = hidden_dims[i], hidden_dims[i + 1]
        key, wk, bk = jax.random.split(key, 3)
        bound = 1.0 / jnp.sqrt(jnp.float32(fan_in))
        w = jax.random.uniform(
            wk, (fan_out, fan_in), jnp.float32, minval=-bound, maxval=bound
        )
        b = jax.random.uniform(
            bk, (fan_out,), jnp.float32, minval=-bound, maxval=bound
        )
        params.append((w, b))
    return params


def prepare_fused_params(params):
    """One-time layout plumbing (outside the forward path):
    transpose weights to (in, out), zero-pad feature dims to 128 lanes, and
    store biases as (1, N_pad). Returns (fused_params, dims)."""
    fused = []
    dims = []
    for w, b in params:
        fan_out, fan_in = w.shape
        k_pad = _round_up(fan_in, _LANE)
        n_pad = _round_up(fan_out, _LANE)
        w_t = jnp.zeros((k_pad, n_pad), jnp.float32).at[:fan_in, :fan_out].set(w.T)
        b2 = jnp.zeros((1, n_pad), jnp.float32).at[0, :fan_out].set(b)
        fused.append((w_t, b2))
        dims.append((fan_in, fan_out))
    return fused, tuple(dims)


@functools.partial(jax.jit, static_argnames=("dims", "negative_slope"))
def feedforward_fused(x, fused_params, dims, negative_slope=0.2):
    """x: (M, hidden_dims[0]) f32. fused_params/dims from prepare_fused_params."""
    M, K = x.shape
    assert K == dims[0][0]
    num_layers = len(fused_params)
    k0_pad = fused_params[0][0].shape[0]
    n_last_pad = fused_params[-1][0].shape[1]
    out_dim = dims[-1][1]

    # Batch tiling: whole (sublane-padded) batch in one block if small, else
    # up to 512-row tiles on a "parallel" grid axis (megacore sharding).
    m_pad = _round_up(M, _SUBLANE)
    tm = min(m_pad, _MAX_TM)
    m_pad = _round_up(m_pad, tm)
    grid_m = m_pad // tm

    x_p = jnp.pad(x, ((0, m_pad - M), (0, k0_pad - K)))

    in_specs = [pl.BlockSpec((tm, k0_pad), lambda i: (i, 0))]
    flat_inputs = [x_p]
    for w_t, b2 in fused_params:
        kp, np_ = w_t.shape
        in_specs.append(pl.BlockSpec((kp, np_), lambda i: (0, 0)))
        in_specs.append(pl.BlockSpec((1, np_), lambda i: (0, 0)))
        flat_inputs.append(w_t)
        flat_inputs.append(b2)

    kernel = _make_fused_mlp_kernel(num_layers, negative_slope)
    out_p = pl.pallas_call(
        kernel,
        out_shape=jax.ShapeDtypeStruct((m_pad, n_last_pad), jnp.float32),
        grid_spec=pltpu.PrefetchScalarGridSpec(
            num_scalar_prefetch=0,
            grid=(grid_m,),
            in_specs=in_specs,
            out_specs=pl.BlockSpec((tm, n_last_pad), lambda i: (i, 0)),
        ),
        compiler_params=pltpu.CompilerParams(
            dimension_semantics=("parallel",),
        ),
    )(*flat_inputs)

    return out_p[:M, :out_dim]


def feedforward_ref(x, params, negative_slope=0.2):
    """Pure-JAX reference (PyTorch Feedforward.forward semantics)."""
    n = len(params)
    for i, (w, b) in enumerate(params):
        x = x @ w.T + b
        if i < n - 1:
            x = jnp.where(x > 0, x, negative_slope * x)
    return x


if __name__ == "__main__":
    key = jax.random.PRNGKey(0)
    hidden_dims = (32, 64, 48, 16)   # 3 Linear layers; LeakyReLU(0.2) after first two
    batch = 8

    key, xk, pk = jax.random.split(key, 3)
    x = jax.random.normal(xk, (batch, hidden_dims[0]), jnp.float32)
    params = init_feedforward_params(pk, hidden_dims)

    # One-time layout prep (transpose + pad) — NOT in the per-call forward path.
    fused_params, dims = prepare_fused_params(params)

    out = feedforward_fused(x, fused_params, dims)
    out = jax.block_until_ready(out)

    ref = feedforward_ref(x, params)
    assert out.shape == (batch, hidden_dims[-1])
    assert jnp.allclose(out, ref, atol=1e-5, rtol=1e-5), "mismatch vs reference"

    print("KERNEL_OK")
</pallas_src>

<mosaic_0001>
module attributes {stable_mosaic.version = 11 : i64} {
  func.func @kernel(%arg0: i32, %arg1: memref<8x128xf32, #tpu.memory_space<vmem>>, %arg2: memref<128x128xf32, #tpu.memory_space<vmem>>, %arg3: memref<1x128xf32, #tpu.memory_space<vmem>>, %arg4: memref<128x128xf32, #tpu.memory_space<vmem>>, %arg5: memref<1x128xf32, #tpu.memory_space<vmem>>, %arg6: memref<128x128xf32, #tpu.memory_space<vmem>>, %arg7: memref<1x128xf32, #tpu.memory_space<vmem>>, %arg8: memref<8x128xf32, #tpu.memory_space<vmem>>) attributes {dimension_semantics = [#tpu.dimension_semantics<parallel>], iteration_bounds = array<i64: 1>, scalar_prefetch = 0 : i64, scratch_operands = 0 : i64, tpu.core_type = #tpu.core_type<tc>, window_params = [{transform_indices = @transform_0, window_bounds = array<i64: 8, 128>}, {pipeline_mode = #tpu.pipeline_mode<synchronous>, transform_indices = @transform_1, window_bounds = array<i64: 128, 128>}, {pipeline_mode = #tpu.pipeline_mode<synchronous>, transform_indices = @transform_2, window_bounds = array<i64: 1, 128>}, {pipeline_mode = #tpu.pipeline_mode<synchronous>, transform_indices = @transform_3, window_bounds = array<i64: 128, 128>}, {pipeline_mode = #tpu.pipeline_mode<synchronous>, transform_indices = @transform_4, window_bounds = array<i64: 1, 128>}, {pipeline_mode = #tpu.pipeline_mode<synchronous>, transform_indices = @transform_5, window_bounds = array<i64: 128, 128>}, {pipeline_mode = #tpu.pipeline_mode<synchronous>, transform_indices = @transform_6, window_bounds = array<i64: 1, 128>}, {transform_indices = @transform_7, window_bounds = array<i64: 8, 128>}]} {
    %c0 = arith.constant 0 : index
    %c0_0 = arith.constant 0 : index
    %0 = vector.load %arg1[%c0, %c0_0] : memref<8x128xf32, #tpu.memory_space<vmem>>, vector<8x128xf32>
    %c0_1 = arith.constant 0 : index
    %c0_2 = arith.constant 0 : index
    %1 = vector.load %arg2[%c0_1, %c0_2] : memref<128x128xf32, #tpu.memory_space<vmem>>, vector<128x128xf32>
    %c0_3 = arith.constant 0 : index
    %c0_4 = arith.constant 0 : index
    %2 = vector.load %arg3[%c0_3, %c0_4] : memref<1x128xf32, #tpu.memory_space<vmem>>, vector<1x128xf32>
    %cst = arith.constant dense<0.000000e+00> : vector<8x128xf32>
    %3 = tpu.matmul %0, %1, %cst {dimension_numbers = #tpu.dot_dimension_numbers<[1], [0], [0], [1], [0, 0, 1, 1], [], []>} : vector<8x128xf32>, vector<128x128xf32>, vector<8x128xf32> -> vector<8x128xf32>
    %4 = vector.broadcast %2 : vector<1x128xf32> to vector<8x128xf32>
    %5 = arith.addf %3, %4 : vector<8x128xf32>
    %cst_5 = arith.constant 0.000000e+00 : f32
    %6 = vector.broadcast %cst_5 : f32 to vector<8x128xf32>
    %7 = arith.cmpf ogt, %5, %6 : vector<8x128xf32>
    %cst_6 = arith.constant 2.000000e-01 : f32
    %8 = vector.broadcast %cst_6 : f32 to vector<8x128xf32>
    %9 = arith.mulf %8, %5 : vector<8x128xf32>
    %10 = arith.select %7, %5, %9 : vector<8x128xi1>, vector<8x128xf32>
    %c0_7 = arith.constant 0 : index
    %c0_8 = arith.constant 0 : index
    %11 = vector.load %arg4[%c0_7, %c0_8] : memref<128x128xf32, #tpu.memory_space<vmem>>, vector<128x128xf32>
    %c0_9 = arith.constant 0 : index
    %c0_10 = arith.constant 0 : index
    %12 = vector.load %arg5[%c0_9, %c0_10] : memref<1x128xf32, #tpu.memory_space<vmem>>, vector<1x128xf32>
    %cst_11 = arith.constant dense<0.000000e+00> : vector<8x128xf32>
    %13 = tpu.matmul %10, %11, %cst_11 {dimension_numbers = #tpu.dot_dimension_numbers<[1], [0], [0], [1], [0, 0, 1, 1], [], []>} : vector<8x128xf32>, vector<128x128xf32>, vector<8x128xf32> -> vector<8x128xf32>
    %14 = vector.broadcast %12 : vector<1x128xf32> to vector<8x128xf32>
    %15 = arith.addf %13, %14 : vector<8x128xf32>
    %cst_12 = arith.constant 0.000000e+00 : f32
    %16 = vector.broadcast %cst_12 : f32 to vector<8x128xf32>
    %17 = arith.cmpf ogt, %15, %16 : vector<8x128xf32>
    %cst_13 = arith.constant 2.000000e-01 : f32
    %18 = vector.broadcast %cst_13 : f32 to vector<8x128xf32>
    %19 = arith.mulf %18, %15 : vector<8x128xf32>
    %20 = arith.select %17, %15, %19 : vector<8x128xi1>, vector<8x128xf32>
    %c0_14 = arith.constant 0 : index
    %c0_15 = arith.constant 0 : index
    %21 = vector.load %arg6[%c0_14, %c0_15] : memref<128x128xf32, #tpu.memory_space<vmem>>, vector<128x128xf32>
    %c0_16 = arith.constant 0 : index
    %c0_17 = arith.constant 0 : index
    %22 = vector.load %arg7[%c0_16, %c0_17] : memref<1x128xf32, #tpu.memory_space<vmem>>, vector<1x128xf32>
    %cst_18 = arith.constant dense<0.000000e+00> : vector<8x128xf32>
    %23 = tpu.matmul %20, %21, %cst_18 {dimension_numbers = #tpu.dot_dimension_numbers<[1], [0], [0], [1], [0, 0, 1, 1], [], []>} : vector<8x128xf32>, vector<128x128xf32>, vector<8x128xf32> -> vector<8x128xf32>
    %24 = vector.broadcast %22 : vector<1x128xf32> to vector<8x128xf32>
    %25 = arith.addf %23, %24 : vector<8x128xf32>
    %c0_19 = arith.constant 0 : index
    %c0_20 = arith.constant 0 : index
    %26 = vector.load %arg8[%c0_19, %c0_20] : memref<8x128xf32, #tpu.memory_space<vmem>>, vector<8x128xf32>
    tpu.vector_store %arg8[%c0_19, %c0_20], %25 {strides = array<i32>} : memref<8x128xf32, #tpu.memory_space<vmem>>, vector<8x128xf32>,
    return
  }
  func.func @transform_0(%arg0: i32) -> (i32, i32) {
    %c0_i32 = arith.constant 0 : i32
    %c0_i32_0 = arith.constant 0 : i32
    return %arg0, %c0_i32 : i32, i32
  }
  func.func @transform_1(%arg0: i32) -> (i32, i32) {
    %c0_i32 = arith.constant 0 : i32
    %c0_i32_0 = arith.constant 0 : i32
    %c0_i32_1 = arith.constant 0 : i32
    return %c0_i32, %c0_i32_0 : i32, i32
  }
  func.func @transform_2(%arg0: i32) -> (i32, i32) {
    %c0_i32 = arith.constant 0 : i32
    %c0_i32_0 = arith.constant 0 : i32
    %c0_i32_1 = arith.constant 0 : i32
    return %c0_i32, %c0_i32_0 : i32, i32
  }
  func.func @transform_3(%arg0: i32) -> (i32, i32) {
    %c0_i32 = arith.constant 0 : i32
    %c0_i32_0 = arith.constant 0 : i32
    %c0_i32_1 = arith.constant 0 : i32
    return %c0_i32, %c0_i32_0 : i32, i32
  }
  func.func @transform_4(%arg0: i32) -> (i32, i32) {
    %c0_i32 = arith.constant 0 : i32
    %c0_i32_0 = arith.constant 0 : i32
    %c0_i32_1 = arith.constant 0 : i32
    return %c0_i32, %c0_i32_0 : i32, i32
  }
  func.func @transform_5(%arg0: i32) -> (i32, i32) {
    %c0_i32 = arith.constant 0 : i32
    %c0_i32_0 = arith.constant 0 : i32
    %c0_i32_1 = arith.constant 0 : i32
    return %c0_i32, %c0_i32_0 : i32, i32
  }
  func.func @transform_6(%arg0: i32) -> (i32, i32) {
    %c0_i32 = arith.constant 0 : i32
    %c0_i32_0 = arith.constant 0 : i32
    %c0_i32_1 = arith.constant 0 : i32
    return %c0_i32, %c0_i32_0 : i32, i32
  }
  func.func @transform_7(%arg0: i32) -> (i32, i32) {
    %c0_i32 = arith.constant 0 : i32
    %c0_i32_0 = arith.constant 0 : i32
    return %arg0, %c0_i32 : i32, i32
  }
}

</mosaic_0001>

<llo_original>
// kernel: feedforward_fused.1
$region0: #{feedforward_fused.1}
  #allocation0 [shape = 'u32[]', space=smem, size = 0x4, offset = 0x4, fixed_abs, tag = 'smem constant byte address 0x4 - core index']
  #allocation1 [shape = 'u32[72,128]{1,0:T(1,128)}', space=vmem, size = 0x9000, scoped, tag = 'internal scratch']
  %s0 = inlined_call_operand.vmem [shape: f32[8,128], index: 0, kind: input, shape index: {}]
  %s1 = inlined_call_operand.hbm [shape: f32[128,128], index: 1, kind: input, shape index: {}]
  %s2 = inlined_call_operand.vmem [shape: f32[1,128], index: 2, kind: input, shape index: {}]
  %s3 = inlined_call_operand.hbm [shape: f32[128,128], index: 3, kind: input, shape index: {}]
  %s4 = inlined_call_operand.vmem [shape: f32[1,128], index: 4, kind: input, shape index: {}]
  %s5 = inlined_call_operand.hbm [shape: f32[128,128], index: 5, kind: input, shape index: {}]
  %s6 = inlined_call_operand.vmem [shape: f32[1,128], index: 6, kind: input, shape index: {}]
  %s7 = inlined_call_operand.hbm [shape: f32[8,128], index: 7, kind: output, shape index: {}]
  %s8 = sld [smem:[#allocation0]]
  $region50: #{feedforward_fused.1} parent=0
    _
  %s10 = ssub.s32 1, %s8
  %s11 = scalar_select 0, %s10, %s8
  $region1: #{feedforward_fused.1} parent=0
    #allocation2 [shape = 'u8[65536]{0}', space=vmem, size = 0x10000, scoped, tag = 'input window, operand 1, single buffered']
    #allocation3 [shape = 's32[1]{0}', space=sflag, size = 0x4, scoped, tag = 'scoped memory for feedforward_fused.1']
    #allocation4 [shape = 's32[1]{0}', space=sflag, size = 0x4, scoped, tag = 'scoped memory for feedforward_fused.1']
    #allocation5 [shape = 'u8[65536]{0}', space=vmem, size = 0x10000, scoped, tag = 'input window, operand 3, single buffered']
    #allocation6 [shape = 's32[1]{0}', space=sflag, size = 0x4, scoped, tag = 'scoped memory for feedforward_fused.1']
    #allocation7 [shape = 'u8[65536]{0}', space=vmem, size = 0x10000, scoped, tag = 'input window, operand 5, single buffered']
    #allocation8 [shape = 'u8[4096]{0}', space=vmem, size = 0x1000, scoped, tag = 'output window, operand 0, single buffered']
    %12 = vsyncpa [#allocation3], 0
    %13 = vsyncpa [#allocation6], 0
    %14 = vsyncpa [#allocation4], 0
    // Predicated region
    $region2: #{feedforward_fused.1} parent=1 // pred_check
      _
    $region3: #{feedforward_fused.1} parent=1 // pred_check_branch
      %16 = sbr.rel (0) target = $region5
    $region4: #{feedforward_fused.1} parent=1 // pred_region
      _
    $region5: #{feedforward_fused.1} parent=1 // pred_fallthru
      _
    // Predicated region
    $region6: #{feedforward_fused.1} parent=1 // pred_check
      _
    $region7: #{feedforward_fused.1} parent=1 // pred_check_branch
      %18 = sbr.rel (0) target = $region9
    $region8: #{feedforward_fused.1} parent=1 // pred_region
      %20 = vsyncadd [#allocation3], 0
      %s21 = sshll.u32 %s1, 4
      %s22 = int_to_ptr.hbm [resolvable:$true] %s21
      %s23 = sshll.u32 [#allocation2], 4
      %s24 = int_to_ptr.vmem [resolvable:$true] %s23
      %29 = dma.hbm_to_vmem [thread:$0]  %s22, 2048, %s24, [#allocation3], 128, 128, 8
    $region9: #{feedforward_fused.1} parent=1 // pred_fallthru
      _
    // Predicated region
    $region10: #{feedforward_fused.1} parent=1 // pred_check
      _
    $region11: #{feedforward_fused.1} parent=1 // pred_check_branch
      %31 = sbr.rel (0) target = $region13
    $region12: #{feedforward_fused.1} parent=1 // pred_region
      _
    $region13: #{feedforward_fused.1} parent=1 // pred_fallthru
      _
    // Predicated region
    $region14: #{feedforward_fused.1} parent=1 // pred_check
      _
    $region15: #{feedforward_fused.1} parent=1 // pred_check_branch
      %33 = sbr.rel (0) target = $region17
    $region16: #{feedforward_fused.1} parent=1 // pred_region
      %35 = vsyncadd [#allocation6], 0
      %s36 = sshll.u32 %s3, 4
      %s37 = int_to_ptr.hbm [resolvable:$true] %s36
      %s38 = sshll.u32 [#allocation5], 4
      %s39 = int_to_ptr.vmem [resolvable:$true] %s38
      %44 = dma.hbm_to_vmem [thread:$0]  %s37, 2048, %s39, [#allocation6], 128, 128, 8
    $region17: #{feedforward_fused.1} parent=1 // pred_fallthru
      _
    // Predicated region
    $region18: #{feedforward_fused.1} parent=1 // pred_check
      _
    $region19: #{feedforward_fused.1} parent=1 // pred_check_branch
      %46 = sbr.rel (0) target = $region21
    $region20: #{feedforward_fused.1} parent=1 // pred_region
      _
    $region21: #{feedforward_fused.1} parent=1 // pred_fallthru
      _
    // Predicated region
    $region22: #{feedforward_fused.1} parent=1 // pred_check
      _
    $region23: #{feedforward_fused.1} parent=1 // pred_check_branch
      %48 = sbr.rel (0) target = $region25
    $region24: #{feedforward_fused.1} parent=1 // pred_region
      %50 = vsyncadd [#allocation6], 0
      %s51 = sshll.u32 %s5, 4
      %s52 = int_to_ptr.hbm [resolvable:$true] %s51
      %s53 = sshll.u32 [#allocation7], 4
      %s54 = int_to_ptr.vmem [resolvable:$true] %s53
      %59 = dma.hbm_to_vmem [thread:$0]  %s52, 2048, %s54, [#allocation6], 128, 128, 8
    $region25: #{feedforward_fused.1} parent=1 // pred_fallthru
      _
    // Predicated region
    $region26: #{feedforward_fused.1} parent=1 // pred_check
      _
    $region27: #{feedforward_fused.1} parent=1 // pred_check_branch
      %61 = sbr.rel (0) target = $region29
    $region28: #{feedforward_fused.1} parent=1 // pred_region
      _
    $region29: #{feedforward_fused.1} parent=1 // pred_fallthru
      _
    // Predicated region
    $region30: #{feedforward_fused.1} parent=1 // pred_check
      _
    $region31: #{feedforward_fused.1} parent=1 // pred_check_branch
      %63 = sbr.rel (0) target = $region33
    $region32: #{feedforward_fused.1} parent=1 // pred_region
      %65 = dma.done [#allocation3], 2048
    $region33: #{feedforward_fused.1} parent=1 // pred_fallthru
      _
    // Predicated region
    $region34: #{feedforward_fused.1} parent=1 // pred_check
      _
    $region35: #{feedforward_fused.1} parent=1 // pred_check_branch
      %67 = sbr.rel (0) target = $region37
    $region36: #{feedforward_fused.1} parent=1 // pred_region
      %69 = dma.done [#allocation6], 2048
    $region37: #{feedforward_fused.1} parent=1 // pred_fallthru
      _
    // Predicated region
    $region38: #{feedforward_fused.1} parent=1 // pred_check
      _
    $region39: #{feedforward_fused.1} parent=1 // pred_check_branch
      %71 = sbr.rel (0) target = $region41
    $region40: #{feedforward_fused.1} parent=1 // pred_region
      %73 = dma.done [#allocation6], 2048
    $region41: #{feedforward_fused.1} parent=1 // pred_fallthru
      _
    %v74 = vld [vmem:[%s0] sm:$0xff]
    %v75 = vld [vmem:[#allocation2] sm:$0xff]
    %v76 = vld [vmem:[#allocation2 + $0x8] sm:$0xff]
    %v77 = vld [vmem:[#allocation2 + $0x10] sm:$0xff]
    %v78 = vld [vmem:[#allocation2 + $0x18] sm:$0xff]
    %v79 = vld [vmem:[#allocation2 + $0x20] sm:$0xff]
    %v80 = vld [vmem:[#allocation2 + $0x28] sm:$0xff]
    %v81 = vld [vmem:[#allocation2 + $0x30] sm:$0xff]
    %v82 = vld [vmem:[#allocation2 + $0x38] sm:$0xff]
    %v83 = vld [vmem:[#allocation2 + $0x40] sm:$0xff]
    %v84 = vld [vmem:[#allocation2 + $0x48] sm:$0xff]
    %v85 = vld [vmem:[#allocation2 + $0x50] sm:$0xff]
    %v86 = vld [vmem:[#allocation2 + $0x58] sm:$0xff]
    %v87 = vld [vmem:[#allocation2 + $0x60] sm:$0xff]
    %v88 = vld [vmem:[#allocation2 + $0x68] sm:$0xff]
    %v89 = vld [vmem:[#allocation2 + $0x70] sm:$0xff]
    %v90 = vld [vmem:[#allocation2 + $0x78] sm:$0xff]
    %v91 = vld [vmem:[%s2] sm:$0x1]
    %v93 = vperm.slane %v91, 0
    %95 = vmatpush.msra.mxu0 %v90
    %96 = vmatpush.msra.mxu0 %v89
    %97 = vmatpush.msra.mxu0 %v88
    %98 = vmatpush.msra.mxu0 %v87
    %99 = vmatpush.msra.mxu0 %v86
    %100 = vmatpush.msra.mxu0 %v85
    %101 = vmatpush.msra.mxu0 %v84
    %102 = vmatpush.msra.mxu0 %v83
    %103 = vmatpush.msra.mxu0 %v82
    %104 = vmatpush.msra.mxu0 %v81
    %105 = vmatpush.msra.mxu0 %v80
    %106 = vmatpush.msra.mxu0 %v79
    %107 = vmatpush.msra.mxu0 %v78
    %108 = vmatpush.msra.mxu0 %v77
    %109 = vmatpush.msra.mxu0 %v76
    %110 = vmatpush.msra.mxu0 %v75
    %111 = vmatmul.f32.gmra.mxu0 %v74
    %v112 = vpop.f32.mrf.mxu0
    %v113 = vadd.f32 %v93, %v112
    %114 = vdwg.mxu0
    %vm115 = vcmp.gt.f32.partialorder %v113, 0.0
    %v116 = vmul.f32 %v113, 0.2
    %v117 = vsel %vm115, %v113, %v116
    %v118 = vld [vmem:[#allocation5] sm:$0xff]
    %v119 = vld [vmem:[#allocation5 + $0x8] sm:$0xff]
    %v120 = vld [vmem:[#allocation5 + $0x10] sm:$0xff]
    %v121 = vld [vmem:[#allocation5 + $0x18] sm:$0xff]
    %v122 = vld [vmem:[#allocation5 + $0x20] sm:$0xff]
    %v123 = vld [vmem:[#allocation5 + $0x28] sm:$0xff]
    %v124 = vld [vmem:[#allocation5 + $0x30] sm:$0xff]
    %v125 = vld [vmem:[#allocation5 + $0x38] sm:$0xff]
    %v126 = vld [vmem:[#allocation5 + $0x40] sm:$0xff]
    %v127 = vld [vmem:[#allocation5 + $0x48] sm:$0xff]
    %v128 = vld [vmem:[#allocation5 + $0x50] sm:$0xff]
    %v129 = vld [vmem:[#allocation5 + $0x58] sm:$0xff]
    %v130 = vld [vmem:[#allocation5 + $0x60] sm:$0xff]
    %v131 = vld [vmem:[#allocation5 + $0x68] sm:$0xff]
    %v132 = vld [vmem:[#allocation5 + $0x70] sm:$0xff]
    %v133 = vld [vmem:[#allocation5 + $0x78] sm:$0xff]
    %v134 = vld [vmem:[%s4] sm:$0x1]
    %v136 = vperm.slane %v134, 0
    %138 = vmatpush.msra.mxu0 %v133
    %139 = vmatpush.msra.mxu0 %v132
    %140 = vmatpush.msra.mxu0 %v131
    %141 = vmatpush.msra.mxu0 %v130
    %142 = vmatpush.msra.mxu0 %v129
    %143 = vmatpush.msra.mxu0 %v128
    %144 = vmatpush.msra.mxu0 %v127
    %145 = vmatpush.msra.mxu0 %v126
    %146 = vmatpush.msra.mxu0 %v125
    %147 = vmatpush.msra.mxu0 %v124
    %148 = vmatpush.msra.mxu0 %v123
    %149 = vmatpush.msra.mxu0 %v122
    %150 = vmatpush.msra.mxu0 %v121
    %151 = vmatpush.msra.mxu0 %v120
    %152 = vmatpush.msra.mxu0 %v119
    %153 = vmatpush.msra.mxu0 %v118
    %154 = vmatmul.f32.gmra.mxu0 %v117
    %v155 = vpop.f32.mrf.mxu0
    %v156 = vadd.f32 %v136, %v155
    %157 = vdwg.mxu0
    %vm158 = vcmp.gt.f32.partialorder %v156, 0.0
    %v159 = vmul.f32 %v156, 0.2
    %v160 = vsel %vm158, %v156, %v159
    %v161 = vld [vmem:[#allocation7] sm:$0xff]
    %v162 = vld [vmem:[#allocation7 + $0x8] sm:$0xff]
    %v163 = vld [vmem:[#allocation7 + $0x10] sm:$0xff]
    %v164 = vld [vmem:[#allocation7 + $0x18] sm:$0xff]
    %v165 = vld [vmem:[#allocation7 + $0x20] sm:$0xff]
    %v166 = vld [vmem:[#allocation7 + $0x28] sm:$0xff]
    %v167 = vld [vmem:[#allocation7 + $0x30] sm:$0xff]
    %v168 = vld [vmem:[#allocation7 + $0x38] sm:$0xff]
    %v169 = vld [vmem:[#allocation7 + $0x40] sm:$0xff]
    %v170 = vld [vmem:[#allocation7 + $0x48] sm:$0xff]
    %v171 = vld [vmem:[#allocation7 + $0x50] sm:$0xff]
    %v172 = vld [vmem:[#allocation7 + $0x58] sm:$0xff]
    %v173 = vld [vmem:[#allocation7 + $0x60] sm:$0xff]
    %v174 = vld [vmem:[#allocation7 + $0x68] sm:$0xff]
    %v175 = vld [vmem:[#allocation7 + $0x70] sm:$0xff]
    %v176 = vld [vmem:[#allocation7 + $0x78] sm:$0xff]
    %v177 = vld [vmem:[%s6] sm:$0x1]
    %v179 = vperm.slane %v177, 0
    %181 = vmatpush.msra.mxu0 %v176
    %182 = vmatpush.msra.mxu0 %v175
    %183 = vmatpush.msra.mxu0 %v174
    %184 = vmatpush.msra.mxu0 %v173
    %185 = vmatpush.msra.mxu0 %v172
    %186 = vmatpush.msra.mxu0 %v171
    %187 = vmatpush.msra.mxu0 %v170
    %188 = vmatpush.msra.mxu0 %v169
    %189 = vmatpush.msra.mxu0 %v168
    %190 = vmatpush.msra.mxu0 %v167
    %191 = vmatpush.msra.mxu0 %v166
    %192 = vmatpush.msra.mxu0 %v165
    %193 = vmatpush.msra.mxu0 %v164
    %194 = vmatpush.msra.mxu0 %v163
    %195 = vmatpush.msra.mxu0 %v162
    %196 = vmatpush.msra.mxu0 %v161
    %197 = vmatmul.f32.gmra.mxu0 %v160
    %v198 = vpop.f32.mrf.mxu0
    %v199 = vadd.f32 %v179, %v198
    %200 = vdwg.mxu0
    %201 = vst [vmem:[#allocation8] sm:$0xff] %v199
    // Predicated region
    $region42: #{feedforward_fused.1} parent=1 // pred_check
      _
    $region43: #{feedforward_fused.1} parent=1 // pred_check_branch
      %203 = sbr.rel (0) target = $region45
    $region44: #{feedforward_fused.1} parent=1 // pred_region
      %205 = vsyncadd [#allocation4], 0
      %s207 = sshll.u32 [#allocation8], 4
      %s208 = int_to_ptr.vmem [resolvable:$true] %s207
      %s209 = sshll.u32 %s7, 4
      %s210 = int_to_ptr.hbm [resolvable:$true] %s209
      %212 = dma.vmem_to_hbm [thread:$0]  %s208, 128, %s210, [#allocation4]
    $region45: #{feedforward_fused.1} parent=1 // pred_fallthru
      _
    // Predicated region
    $region46: #{feedforward_fused.1} parent=1 // pred_check
      _
    $region47: #{feedforward_fused.1} parent=1 // pred_check_branch
      %214 = sbr.rel (0) target = $region49
    $region48: #{feedforward_fused.1} parent=1 // pred_region
      %216 = dma.done [#allocation4], 128
    $region49: #{feedforward_fused.1} parent=1 // pred_fallthru
      _
    %217 = vsyncpa [#allocation3], 1
    %218 = vsyncpa [#allocation6], 1
    %219 = vsyncpa [#allocation4], 1

</llo_original>
